<compile_context>
chip_gen: v5e
topology: v5e:2x2
jax: 0.10.0
libtpu: 0.0.40
codegen_flags: <defaults>
</compile_context>

<pallas_src>
import functools

import jax
import jax.numpy as jnp
from jax.experimental import pallas as pl
from jax.experimental.pallas import tpu as pltpu


def attention_kernel(feat_ref, wqkv_ref, bqkv_ref, wc_ref, bc_ref, out_ref, *,
                     batch, n_frames, hidden):
    """Whole batch in one invocation.

    feat_ref : (B*N, F)  bf16   features + positional encodings (flattened batch)
    wqkv_ref : (F, 3H)   bf16   packed [Wq*scale | Wk | Wv]
    bqkv_ref : (1, 3H)   f32    packed [bq*scale | bk | bv]
    wc_ref   : (N, H)    f32    classifier weight, row-major-flatten order
    bc_ref   : (1, 1)    f32    classifier bias
    out_ref  : (B, 1)    f32    sigmoid(logit)
    """
    B, N, H = batch, n_frames, hidden

    # Single fused Q/K/V projection on all B*N rows: bf16 MXU, f32 accumulate.
    feat = feat_ref[...]                                               # (B*N, F)
    qkv = jnp.dot(feat, wqkv_ref[...],
                  preferred_element_type=jnp.float32) + bqkv_ref[...]  # (B*N, 3H)

    q = qkv[:, 0 * H:1 * H].reshape(B, N, H)   # scale already folded in
    k = qkv[:, 1 * H:2 * H].reshape(B, N, H)
    v = qkv[:, 2 * H:3 * H].reshape(B, N, H)

    # scores[b, j, i] = <q_bj, k_bi>  ==  (torch bmm(k, q^T))[b, i, j]
    s = jnp.einsum('bjh,bih->bji', q, k,
                   preferred_element_type=jnp.float32)                 # (B, N, N)

    # torch softmax(dim=1) over the key index i -> last axis of `s` here.
    m = jnp.max(s, axis=-1, keepdims=True)
    e = jnp.exp(s - m)
    denom = jnp.sum(e, axis=-1, keepdims=True)
    p = e * pl.reciprocal(denom, approx=True)                          # (B, N, N)

    # context[b, j, h] = sum_i attention_weights[b, i, j] * v[b, i, h]
    context = jnp.einsum('bji,bih->bjh', p, v,
                         preferred_element_type=jnp.float32)           # (B, N, H)

    # classifier over the row-major flattened (N*H) context; keeping the
    # weight as (N, H) matches torch's `.view(batch, -1)` without a reshape.
    partial = jnp.sum(context * wc_ref[...][None, :, :], axis=2)       # (B, N)
    logit = jnp.sum(partial, axis=1, keepdims=True) + bc_ref[...]      # (B, 1)
    out_ref[...] = jax.nn.sigmoid(logit)


def attention_forward(features, wq, bq, wk, bk, wv, bv, wc, bc, hidden_size):
    """features: (B, n_frames, conv_features) float32.  Returns (B, 1) float32."""
    B, N, F = features.shape
    H = hidden_size
    scale = 1.0 / float(H) ** 0.5  # torch.rsqrt(hidden_size)

    # Fold the attention scale into the Q projection and pack Q/K/V so the
    # kernel performs a single (B*N, F) x (F, 3H) matmul.
    wqkv = jnp.concatenate([wq * scale, wk, wv], axis=1).astype(jnp.bfloat16)
    bqkv = jnp.concatenate([bq * scale, bk, bv], axis=1).astype(jnp.float32)
    feat2d = features.reshape(B * N, F).astype(jnp.bfloat16)
    wc32 = wc.astype(jnp.float32)
    bc32 = bc.astype(jnp.float32)

    kernel = functools.partial(attention_kernel, batch=B, n_frames=N, hidden=H)
    vmem_spec = pl.BlockSpec(memory_space=pltpu.MemorySpace.VMEM)
    out = pl.pallas_call(
        kernel,
        out_shape=jax.ShapeDtypeStruct((B, 1), jnp.float32),
        in_specs=[vmem_spec] * 5,
        out_specs=vmem_spec,
    )(feat2d, wqkv, bqkv, wc32, bc32)
    return out


def create_positional_encodings(conv_features, max_seq_len=100):
    pos = jnp.arange(max_seq_len, dtype=jnp.float32)[:, None]
    dim = jnp.arange(conv_features // 2, dtype=jnp.float32)[None, :]
    exponents = (2.0 * dim) / conv_features
    trig_args = pos / (10000.0 ** exponents)
    pe = jnp.zeros((max_seq_len, conv_features), jnp.float32)
    pe = pe.at[:, 0::2].set(jnp.sin(trig_args))
    pe = pe.at[:, 1::2].set(jnp.cos(trig_args))
    return pe


def feature_extracter(x, w_fe, b_fe):
    # TODO(synk): deterministic stand-in for the injected backbone (global
    # average pool over spatial dims, then linear to conv_features), producing
    # the expected [B, conv_features, 1, 1].
    pooled = jnp.mean(x, axis=(2, 3))            # (B, C)
    feats = pooled @ w_fe + b_fe                 # (B, conv_features)
    return feats[:, :, None, None]


if __name__ == "__main__":
    B, C, Himg, Wimg = 2, 4, 16, 16
    n_frames = 8
    conv_features = 128
    hidden_size = 64

    key = jax.random.PRNGKey(0)
    keys = jax.random.split(key, n_frames + 1)
    images = [jax.random.normal(keys[i], (B, C, Himg, Wimg), jnp.float32)
              for i in range(n_frames)]

    kw = jax.random.split(keys[n_frames], 10)
    s = 0.05
    w_fe = s * jax.random.normal(kw[0], (C, conv_features), jnp.float32)
    b_fe = s * jax.random.normal(kw[1], (conv_features,), jnp.float32)
    wq = s * jax.random.normal(kw[2], (conv_features, hidden_size), jnp.float32)
    bq = s * jax.random.normal(kw[3], (1, hidden_size), jnp.float32)
    wk = s * jax.random.normal(kw[4], (conv_features, hidden_size), jnp.float32)
    bk = s * jax.random.normal(kw[5], (1, hidden_size), jnp.float32)
    wv = s * jax.random.normal(kw[6], (conv_features, hidden_size), jnp.float32)
    bv = s * jax.random.normal(kw[7], (1, hidden_size), jnp.float32)
    # classifier: nn.Linear(hidden_size * n_frames, 1); stored as (n_frames, hidden)
    wc = s * jax.random.normal(kw[8], (n_frames, hidden_size), jnp.float32)
    bc = s * jax.random.normal(kw[9], (1, 1), jnp.float32)

    # ---- glue: per-frame feature extraction, concat, positional encodings ----
    X = []
    for x in images:
        f = feature_extracter(x, w_fe, b_fe)     # (B, conv_features, 1, 1)
        f = jnp.squeeze(f, axis=3)               # (B, conv_features, 1)
        f = jnp.transpose(f, (0, 2, 1))          # (B, 1, conv_features)
        X.append(f)
    features = jnp.concatenate(X, axis=1)        # (B, n_frames, conv_features)
    pe = create_positional_encodings(conv_features)
    features = features + pe[:n_frames][None]

    # ---- Pallas kernel ----
    out = attention_forward(features, wq, bq, wk, bk, wv, bv, wc, bc, hidden_size)
    out = jax.block_until_ready(out)

    # ---- pure-JAX f32 reference (sanity check) ----
    q = features @ wq + bq
    k = features @ wk + bk
    v = features @ wv + bv
    att = jnp.einsum('bih,bjh->bij', k, q) / jnp.sqrt(jnp.float32(hidden_size))
    w = jax.nn.softmax(att, axis=1)
    ctx = jnp.einsum('bij,bih->bjh', w, v).reshape(B, -1)
    ref = jax.nn.sigmoid(ctx @ wc.reshape(-1, 1) + bc[0, 0])

    assert out.shape == (B, 1)
    # bf16 matmul operands + approx reciprocal => relaxed tolerance vs f32 ref.
    assert jnp.allclose(out, ref, atol=1e-2, rtol=1e-2), (
        f"max abs diff {float(jnp.max(jnp.abs(out - ref)))}")
    print("KERNEL_OK")
</pallas_src>

<mosaic_0001>
module attributes {stable_mosaic.version = 11 : i64} {
  func.func @attention_kernel(%arg0: memref<16x128xbf16, #tpu.memory_space<vmem>>, %arg1: memref<128x192xbf16, #tpu.memory_space<vmem>>, %arg2: memref<1x192xf32, #tpu.memory_space<vmem>>, %arg3: memref<8x64xf32, #tpu.memory_space<vmem>>, %arg4: memref<1x1xf32, #tpu.memory_space<vmem>>, %arg5: memref<2x1xf32, #tpu.memory_space<vmem>>) attributes {dimension_semantics = [], scalar_prefetch = 0 : i64, scratch_operands = 0 : i64, tpu.core_type = #tpu.core_type<tc>} {
    %c0 = arith.constant 0 : index
    %c0_0 = arith.constant 0 : index
    %0 = vector.load %arg0[%c0, %c0_0] : memref<16x128xbf16, #tpu.memory_space<vmem>>, vector<16x128xbf16>
    %c0_1 = arith.constant 0 : index
    %c0_2 = arith.constant 0 : index
    %1 = vector.load %arg1[%c0_1, %c0_2] : memref<128x192xbf16, #tpu.memory_space<vmem>>, vector<128x192xbf16>
    %cst = arith.constant dense<0.000000e+00> : vector<16x192xf32>
    %2 = tpu.matmul %0, %1, %cst {dimension_numbers = #tpu.dot_dimension_numbers<[1], [0], [0], [1], [0, 0, 1, 1], [], []>} : vector<16x128xbf16>, vector<128x192xbf16>, vector<16x192xf32> -> vector<16x192xf32>
    %c0_3 = arith.constant 0 : index
    %c0_4 = arith.constant 0 : index
    %3 = vector.load %arg2[%c0_3, %c0_4] : memref<1x192xf32, #tpu.memory_space<vmem>>, vector<1x192xf32>
    %4 = vector.broadcast %3 : vector<1x192xf32> to vector<16x192xf32>
    %5 = arith.addf %2, %4 : vector<16x192xf32>
    %6 = vector.extract_strided_slice %5 {offsets = [0, 0], sizes = [16, 64], strides = [1, 1]} : vector<16x192xf32> to vector<16x64xf32>
    %7 = vector.shape_cast %6 : vector<16x64xf32> to vector<2x8x64xf32>
    %8 = vector.extract_strided_slice %5 {offsets = [0, 64], sizes = [16, 64], strides = [1, 1]} : vector<16x192xf32> to vector<16x64xf32>
    %9 = vector.shape_cast %8 : vector<16x64xf32> to vector<2x8x64xf32>
    %10 = vector.extract_strided_slice %5 {offsets = [0, 128], sizes = [16, 64], strides = [1, 1]} : vector<16x192xf32> to vector<16x64xf32>
    %11 = vector.shape_cast %10 : vector<16x64xf32> to vector<2x8x64xf32>
    "tpu.trace_start"() <{level = 10 : i32, message = "bjh,bih->bji"}> : () -> ()
    %cst_5 = arith.constant dense<0.000000e+00> : vector<2x8x8xf32>
    %12 = tpu.matmul %7, %9, %cst_5 {dimension_numbers = #tpu.dot_dimension_numbers<[2], [2], [1], [1], [0, 0, 0, 1, 1, 1], [0], [0]>} : vector<2x8x64xf32>, vector<2x8x64xf32>, vector<2x8x8xf32> -> vector<2x8x8xf32>
    "tpu.trace_stop"() : () -> ()
    %cst_6 = arith.constant dense<0xFF800000> : vector<2x8xf32>
    %13 = vector.multi_reduction <maximumf>, %12, %cst_6 [2] : vector<2x8x8xf32> to vector<2x8xf32>
    %14 = vector.shape_cast %13 : vector<2x8xf32> to vector<2x8x1xf32>
    %15 = vector.broadcast %14 : vector<2x8x1xf32> to vector<2x8x8xf32>
    %16 = arith.subf %12, %15 : vector<2x8x8xf32>
    %17 = math.exp %16 : vector<2x8x8xf32>
    %cst_7 = arith.constant dense<0.000000e+00> : vector<2x8xf32>
    %18 = vector.multi_reduction <add>, %17, %cst_7 [2] : vector<2x8x8xf32> to vector<2x8xf32>
    %19 = vector.shape_cast %18 : vector<2x8xf32> to vector<2x8x1xf32>
    %20 = tpu.reciprocal %19 {approx = true} : vector<2x8x1xf32> -> vector<2x8x1xf32>
    %21 = vector.broadcast %20 : vector<2x8x1xf32> to vector<2x8x8xf32>
    %22 = arith.mulf %17, %21 : vector<2x8x8xf32>
    "tpu.trace_start"() <{level = 10 : i32, message = "bji,bih->bjh"}> : () -> ()
    %cst_8 = arith.constant dense<0.000000e+00> : vector<2x8x64xf32>
    %23 = tpu.matmul %22, %11, %cst_8 {dimension_numbers = #tpu.dot_dimension_numbers<[2], [1], [1], [2], [0, 0, 0, 1, 1, 2], [0], [0]>} : vector<2x8x8xf32>, vector<2x8x64xf32>, vector<2x8x64xf32> -> vector<2x8x64xf32>
    "tpu.trace_stop"() : () -> ()
    %c0_9 = arith.constant 0 : index
    %c0_10 = arith.constant 0 : index
    %24 = vector.load %arg3[%c0_9, %c0_10] : memref<8x64xf32, #tpu.memory_space<vmem>>, vector<8x64xf32>
    %25 = vector.shape_cast %24 : vector<8x64xf32> to vector<1x8x64xf32>
    %26 = vector.broadcast %25 : vector<1x8x64xf32> to vector<2x8x64xf32>
    %27 = arith.mulf %23, %26 : vector<2x8x64xf32>
    %cst_11 = arith.constant dense<0.000000e+00> : vector<2x8xf32>
    %28 = vector.multi_reduction <add>, %27, %cst_11 [2] : vector<2x8x64xf32> to vector<2x8xf32>
    %cst_12 = arith.constant dense<0.000000e+00> : vector<2xf32>
    %29 = vector.multi_reduction <add>, %28, %cst_12 [1] : vector<2x8xf32> to vector<2xf32>
    %30 = vector.shape_cast %29 : vector<2xf32> to vector<2x1xf32>
    %c0_13 = arith.constant 0 : index
    %c0_14 = arith.constant 0 : index
    %31 = vector.load %arg4[%c0_13, %c0_14] : memref<1x1xf32, #tpu.memory_space<vmem>>, vector<1x1xf32>
    %32 = vector.broadcast %31 : vector<1x1xf32> to vector<2x1xf32>
    %33 = arith.addf %30, %32 : vector<2x1xf32>
    %34 = arith.negf %33 : vector<2x1xf32>
    %35 = math.exp %34 : vector<2x1xf32>
    %cst_15 = arith.constant 1.000000e+00 : f32
    %36 = vector.broadcast %cst_15 : f32 to vector<2x1xf32>
    %37 = arith.addf %36, %35 : vector<2x1xf32>
    %38 = arith.divf %36, %37 : vector<2x1xf32>
    %c0_16 = arith.constant 0 : index
    %c0_17 = arith.constant 0 : index
    %39 = vector.load %arg5[%c0_16, %c0_17] : memref<2x1xf32, #tpu.memory_space<vmem>>, vector<2x1xf32>
    tpu.vector_store %arg5[%c0_16, %c0_17], %38 {strides = array<i32>} : memref<2x1xf32, #tpu.memory_space<vmem>>, vector<2x1xf32>,
    return
  }
}

</mosaic_0001>

<llo_original>
// kernel: tpu_custom_call.1
$region0: #{tpu_custom_call.1}
  #allocation0 [shape = 'u32[]', space=smem, size = 0x4, offset = 0x4, fixed_abs, tag = 'smem constant byte address 0x4 - core index']
  #allocation1 [shape = 'u32[72,128]{1,0:T(1,128)}', space=vmem, size = 0x9000, scoped, tag = 'internal scratch']
  #allocation2 [shape = 'f32[1,1]{1,0:T(1,128)S(1)}', space=vmem, size = 0x200, scoped, tag = 'scoped memory for tpu_custom_call.1']
  %s0 = inlined_call_operand.vmem [shape: bf16[16,128], index: 0, kind: input, shape index: {}]
  %s1 = inlined_call_operand.vmem [shape: bf16[128,192], index: 1, kind: input, shape index: {}]
  %s2 = inlined_call_operand.vmem [shape: f32[1,192], index: 2, kind: input, shape index: {}]
  %s3 = inlined_call_operand.vmem [shape: f32[8,64], index: 3, kind: input, shape index: {}]
  %s4 = inlined_call_operand.<no memory space> [shape: f32[1,1], index: 4, kind: input, shape index: {}]
  %s5 = inlined_call_operand.vmem [shape: f32[2,1], index: 5, kind: output, shape index: {}]
  %s6 = sld [smem:[#allocation0]]
  $region30: #{tpu_custom_call.1} parent=0
    _
  %s8 = ssub.s32 1, %s6
  %s9 = scalar_select 0, %s8, %s6
  %v10 = vstv %s4
  %11 = vst [vmem:[#allocation2] sm:$0x1] %v10
  // Predicated region
  $region2: #{tpu_custom_call.1} parent=0 // pred_check
    _
  $region3: #{tpu_custom_call.1} parent=0 // pred_check_branch
    %13 = sbr.rel (0) target = $region5
  $region4: #{tpu_custom_call.1} parent=0 // pred_region
    _
  $region5: #{tpu_custom_call.1} parent=0 // pred_fallthru
    _
  // Predicated region
  $region6: #{tpu_custom_call.1} parent=0 // pred_check
    _
  $region7: #{tpu_custom_call.1} parent=0 // pred_check_branch
    %15 = sbr.rel (0) target = $region9
  $region8: #{tpu_custom_call.1} parent=0 // pred_region
    _
  $region9: #{tpu_custom_call.1} parent=0 // pred_fallthru
    _
  // Predicated region
  $region10: #{tpu_custom_call.1} parent=0 // pred_check
    _
  $region11: #{tpu_custom_call.1} parent=0 // pred_check_branch
    %17 = sbr.rel (0) target = $region13
  $region12: #{tpu_custom_call.1} parent=0 // pred_region
    _
  $region13: #{tpu_custom_call.1} parent=0 // pred_fallthru
    _
  // Predicated region
  $region14: #{tpu_custom_call.1} parent=0 // pred_check
    _
  $region15: #{tpu_custom_call.1} parent=0 // pred_check_branch
    %19 = sbr.rel (0) target = $region17
  $region16: #{tpu_custom_call.1} parent=0 // pred_region
    _
  $region17: #{tpu_custom_call.1} parent=0 // pred_fallthru
    _
  // Predicated region
  $region18: #{tpu_custom_call.1} parent=0 // pred_check
    _
  $region19: #{tpu_custom_call.1} parent=0 // pred_check_branch
    %21 = sbr.rel (0) target = $region21
  $region20: #{tpu_custom_call.1} parent=0 // pred_region
    _
  $region21: #{tpu_custom_call.1} parent=0 // pred_fallthru
    _
  %v22 = vld [vmem:[%s0] sm:$0xf]
  %v23 = vld [vmem:[%s0 + $0x4] sm:$0xf]
  %v24 = vld [vmem:[%s1] sm:$0xff]
  %v25 = vld [vmem:[%s1 + $0x8] sm:$0xff]
  %v26 = vld [vmem:[%s1 + $0x10] sm:$0xff]
  %v27 = vld [vmem:[%s1 + $0x18] sm:$0xff]
  %v28 = vld [vmem:[%s1 + $0x20] sm:$0xff]
  %v29 = vld [vmem:[%s1 + $0x28] sm:$0xff]
  %v30 = vld [vmem:[%s1 + $0x30] sm:$0xff]
  %v31 = vld [vmem:[%s1 + $0x38] sm:$0xff]
  %v32 = vld [vmem:[%s1 + $0x40] sm:$0xff]
  %v33 = vld [vmem:[%s1 + $0x48] sm:$0xff]
  %v34 = vld [vmem:[%s1 + $0x50] sm:$0xff]
  %v35 = vld [vmem:[%s1 + $0x58] sm:$0xff]
  %v36 = vld [vmem:[%s1 + $0x60] sm:$0xff]
  %v37 = vld [vmem:[%s1 + $0x68] sm:$0xff]
  %v38 = vld [vmem:[%s1 + $0x70] sm:$0xff]
  %v39 = vld [vmem:[%s1 + $0x78] sm:$0xff]
  %v40 = vld [vmem:[%s2] sm:$0x3]
  %v42 = vperm.slane %v40, 0
  %v43 = vperm.slane %v40, 1
  %v48 = vunpack.c.l.b16 %v22
  %v49 = vunpack.c.l.b16 %v23
  %v50 = vpack.c.b16 %v49, %v48
  %v68 = vunpack.c.l.b16 %v24
  %v69 = vunpack.c.h.b16 %v24
  %v70 = vunpack.c.l.b16 %v25
  %v71 = vunpack.c.h.b16 %v25
  %v72 = vunpack.c.l.b16 %v26
  %v73 = vunpack.c.h.b16 %v26
  %v74 = vunpack.c.l.b16 %v27
  %v75 = vunpack.c.h.b16 %v27
  %v76 = vunpack.c.l.b16 %v28
  %v77 = vunpack.c.h.b16 %v28
  %v78 = vunpack.c.l.b16 %v29
  %v79 = vunpack.c.h.b16 %v29
  %v80 = vunpack.c.l.b16 %v30
  %v81 = vunpack.c.h.b16 %v30
  %v82 = vunpack.c.l.b16 %v31
  %v83 = vunpack.c.h.b16 %v31
  %v84 = vunpack.c.l.b16 %v32
  %v85 = vunpack.c.h.b16 %v32
  %v86 = vunpack.c.l.b16 %v33
  %v87 = vunpack.c.h.b16 %v33
  %v88 = vunpack.c.l.b16 %v34
  %v89 = vunpack.c.h.b16 %v34
  %v90 = vunpack.c.l.b16 %v35
  %v91 = vunpack.c.h.b16 %v35
  %v92 = vunpack.c.l.b16 %v36
  %v93 = vunpack.c.h.b16 %v36
  %v94 = vunpack.c.l.b16 %v37
  %v95 = vunpack.c.h.b16 %v37
  %v96 = vunpack.c.l.b16 %v38
  %v97 = vunpack.c.h.b16 %v38
  %v98 = vunpack.c.l.b16 %v39
  %v99 = vunpack.c.h.b16 %v39
  %v100 = vpack.c.b16 %v70, %v68
  %v101 = vpack.c.b16 %v71, %v69
  %v102 = vpack.c.b16 %v74, %v72
  %v103 = vpack.c.b16 %v75, %v73
  %v104 = vpack.c.b16 %v78, %v76
  %v105 = vpack.c.b16 %v79, %v77
  %v106 = vpack.c.b16 %v82, %v80
  %v107 = vpack.c.b16 %v83, %v81
  %v108 = vpack.c.b16 %v86, %v84
  %v109 = vpack.c.b16 %v87, %v85
  %v110 = vpack.c.b16 %v90, %v88
  %v111 = vpack.c.b16 %v91, %v89
  %v112 = vpack.c.b16 %v94, %v92
  %v113 = vpack.c.b16 %v95, %v93
  %v114 = vpack.c.b16 %v98, %v96
  %v115 = vpack.c.b16 %v99, %v97
  %132 = vmatpush.bf16.msra.mxu0 %v114
  %133 = vmatpush.bf16.msra.mxu0 %v112
  %134 = vmatpush.bf16.msra.mxu0 %v110
  %135 = vmatpush.bf16.msra.mxu0 %v108
  %136 = vmatpush.bf16.msra.mxu0 %v106
  %137 = vmatpush.bf16.msra.mxu0 %v104
  %138 = vmatpush.bf16.msra.mxu0 %v102
  %139 = vmatpush.bf16.msra.mxu0 %v100
  %140 = vmatmul.bf16.gmra.mxu0 %v50
  %v141 = vpop.f32.mrf.mxu0
  %v142 = vadd.f32 %v42, %v141
  %v143 = vpop.f32.mrf.mxu0
  %v144 = vadd.f32 %v42, %v143
  %145 = vdwg.mxu0
  %146 = vmatpush.bf16.msra.mxu0 %v115
  %147 = vmatpush.bf16.msra.mxu0 %v113
  %148 = vmatpush.bf16.msra.mxu0 %v111
  %149 = vmatpush.bf16.msra.mxu0 %v109
  %150 = vmatpush.bf16.msra.mxu0 %v107
  %151 = vmatpush.bf16.msra.mxu0 %v105
  %152 = vmatpush.bf16.msra.mxu0 %v103
  %153 = vmatpush.bf16.msra.mxu0 %v101
  %154 = vmatmul.bf16.gmra.mxu0 %v50
  %v155 = vpop.f32.mrf.mxu0
  %v156 = vadd.f32 %v43, %v155
  %v157 = vpop.f32.mrf.mxu0
  %v158 = vadd.f32 %v43, %v157
  %159 = vdwg.mxu0
  %161 = vrot.lane.b32.xlu0 %v142, 64
  %v162 = vpop.permute.xlu0 %161
  %vm163 = vcmask 523264
  %v164 = vsel %vm163, %v142, 0
  %v166 = vsel %vm163, %v162, 0
  %168 = vmatpush.xpose.msra.mxu0 0.0
  %169 = vmatpush.xpose.msra.mxu0 0.0
  %170 = vmatpush.xpose.msra.mxu0 0.0
  %171 = vmatpush.xpose.msra.mxu0 0.0
  %172 = vmatpush.xpose.msra.mxu0 0.0
  %173 = vmatpush.xpose.msra.mxu0 0.0
  %174 = vmatpush.xpose.msra.mxu0 0.0
  %175 = vmatpush.xpose.msra.mxu0 0.0
  %176 = vmatpush.xpose.msra.mxu0 0.0
  %177 = vmatpush.xpose.msra.mxu0 0.0
  %178 = vmatpush.xpose.msra.mxu0 0.0
  %179 = vmatpush.xpose.msra.mxu0 0.0
  %180 = vmatpush.xpose.msra.mxu0 0.0
  %181 = vmatpush.xpose.msra.mxu0 0.0
  %182 = vmatpush.xpose.msra.mxu0 0.0
  %183 = vmatpush.xpose.msra.mxu0 %v166
  %184 = vmatmul.f32.gmra.mxu0 %v164
  %v185 = vpop.f32.mrf.mxu0
  %v186 = vadd.f32 0.0, %v185
  %187 = vdwg.mxu0
  %189 = vrot.lane.b32.xlu0 %v144, 64
  %v190 = vpop.permute.xlu0 %189
  %v191 = vsel %vm163, %v144, 0
  %v193 = vsel %vm163, %v190, 0
  %195 = vmatpush.xpose.msra.mxu0 0.0
  %196 = vmatpush.xpose.msra.mxu0 0.0
  %197 = vmatpush.xpose.msra.mxu0 0.0
  %198 = vmatpush.xpose.msra.mxu0 0.0
  %199 = vmatpush.xpose.msra.mxu0 0.0
  %200 = vmatpush.xpose.msra.mxu0 0.0
  %201 = vmatpush.xpose.msra.mxu0 0.0
  %202 = vmatpush.xpose.msra.mxu0 0.0
  %203 = vmatpush.xpose.msra.mxu0 0.0
  %204 = vmatpush.xpose.msra.mxu0 0.0
  %205 = vmatpush.xpose.msra.mxu0 0.0
  %206 = vmatpush.xpose.msra.mxu0 0.0
  %207 = vmatpush.xpose.msra.mxu0 0.0
  %208 = vmatpush.xpose.msra.mxu0 0.0
  %209 = vmatpush.xpose.msra.mxu0 0.0
  %210 = vmatpush.xpose.msra.mxu0 %v193
  %211 = vmatmul.f32.gmra.mxu0 %v191
  %v212 = vpop.f32.mrf.mxu0
  %v213 = vadd.f32 0.0, %v212
  %214 = vdwg.mxu0
  %vm215 = vcmask 64512
  %v216 = vsel %vm215, %v186, -inf
  %217 = vmax.xlane.f32.xlu0 %v216
  %v218 = vpop.xlane.xlu0 %217
  %v219 = vsel %vm215, %v213, -inf
  %220 = vmax.xlane.f32.xlu0 %v219
  %v221 = vpop.xlane.xlu0 %220
  %v222 = vsub.f32 %v186, %v218
  %v223 = vsub.f32 %v213, %v221
  %v224 = vmul.f32 %v222, 1.442695
  %v225 = vpow.pop %v224
  %v226 = vmul.f32 %v223, 1.442695
  %v227 = vpow.pop %v226
  %v228 = vsel %vm215, %v225, 0.0
  %229 = vadd.xlane.f32.xlu0 %v228
  %v230 = vpop.xlane.xlu0 %229
  %v231 = vsel %vm215, %v227, 0.0
  %232 = vadd.xlane.f32.xlu0 %v231
  %v233 = vpop.xlane.xlu0 %232
  %v234 = vrcp.pop %v230
  %v235 = vrcp.pop %v233
  %v236 = vmul.f32 %v225, %v234
  %v237 = vmul.f32 %v227, %v235
  %v239 = vsel %vm215, %v236, 0
  %241 = vmatpush.msra.mxu0 0.0
  %242 = vmatpush.msra.mxu0 0.0
  %243 = vmatpush.msra.mxu0 0.0
  %244 = vmatpush.msra.mxu0 0.0
  %245 = vmatpush.msra.mxu0 0.0
  %246 = vmatpush.msra.mxu0 0.0
  %247 = vmatpush.msra.mxu0 0.0
  %248 = vmatpush.msra.mxu0 0.0
  %249 = vmatpush.msra.mxu0 0.0
  %250 = vmatpush.msra.mxu0 0.0
  %251 = vmatpush.msra.mxu0 0.0
  %252 = vmatpush.msra.mxu0 0.0
  %253 = vmatpush.msra.mxu0 0.0
  %254 = vmatpush.msra.mxu0 0.0
  %255 = vmatpush.msra.mxu0 0.0
  %256 = vmatpush.msra.mxu0 %v156
  %257 = vmatmul.f32.gmra.mxu0 %v239
  %v258 = vpop.f32.mrf.mxu0
  %v259 = vadd.f32 0.0, %v258
  %260 = vdwg.mxu0
  %v262 = vsel %vm215, %v237, 0
  %264 = vmatpush.msra.mxu0 0.0
  %265 = vmatpush.msra.mxu0 0.0
  %266 = vmatpush.msra.mxu0 0.0
  %267 = vmatpush.msra.mxu0 0.0
  %268 = vmatpush.msra.mxu0 0.0
  %269 = vmatpush.msra.mxu0 0.0
  %270 = vmatpush.msra.mxu0 0.0
  %271 = vmatpush.msra.mxu0 0.0
  %272 = vmatpush.msra.mxu0 0.0
  %273 = vmatpush.msra.mxu0 0.0
  %274 = vmatpush.msra.mxu0 0.0
  %275 = vmatpush.msra.mxu0 0.0
  %276 = vmatpush.msra.mxu0 0.0
  %277 = vmatpush.msra.mxu0 0.0
  %278 = vmatpush.msra.mxu0 0.0
  %279 = vmatpush.msra.mxu0 %v158
  %280 = vmatmul.f32.gmra.mxu0 %v262
  %v281 = vpop.f32.mrf.mxu0
  %v282 = vadd.f32 0.0, %v281
  %283 = vdwg.mxu0
  %v284 = vld [vmem:[%s3] sm:$0xff]
  %v285 = vmul.f32 %v259, %v284
  %v286 = vmul.f32 %v282, %v284
  %v287 = vsel %vm163, %v285, 0.0
  %288 = vadd.xlane.f32.xlu0 %v287
  %v289 = vpop.xlane.xlu0 %288
  %v290 = vsel %vm163, %v286, 0.0
  %291 = vadd.xlane.f32.xlu0 %v290
  %v292 = vpop.xlane.xlu0 %291
  %v295 = vlaneseq
  %v296 = vand.u32 %v295, 127
  %v297 = vperm.slane %v289, %v296
  %v298 = vperm.slane %v292, %v296
  %vm299 = vcmask 1041409
  %v300 = vsel %vm299, %v298, %v297
  %vm302 = vcmask 58368
  %v303 = vsel %vm302, %v300, 0.0
  %304 = vadd.xlane.f32.xlu0 %v303
  %v305 = vpop.xlane.xlu0 %304
  %v306 = vld [vmem:[#allocation2] sm:$0x1]
  %v308 = vperm.slane %v306, 0
  %v310 = vadd.f32 %v305, %v308
  %v311 = vxor.u32 %v310, 2147483648
  %v312 = vmul.f32 %v311, 1.442695
  %v313 = vpow.pop %v312
  %v314 = vadd.f32 %v313, 1.0
  %v315 = vrcp.pop %v314
  %v316 = vmul.f32 %v314, %v315
  %v317 = vsub.f32 1.0, %v316
  %v318 = vmul.f32 %v315, %v317
  %v319 = vadd.f32 %v315, %v318
  %vm320 = vweird.f32 %v314
  %vm321 = vweird.f32 %v315
  %vm322 = vmor %vm320, %vm321
  %v323 = vsel %vm322, %v315, %v319
  %v324 = vand.u32 2147483647, %v314
  %vm325 = vcmp.eq.f32.partialorder %v324, 8.507059e+37
  %v326 = vand.u32 %v314, 2147483648
  %v327 = vor.u32 1.1754944e-38, %v326
  %v328 = vsel %vm325, %v327, %v323
  %v329 = vmul.f32 1.0, %v328
  %vm330 = vcmask 1024
  %331 = vst.msk [vmem:[%s5] sm:$0x3] %vm330, %v329
  // Predicated region
  $region22: #{tpu_custom_call.1} parent=0 // pred_check
    _
  $region23: #{tpu_custom_call.1} parent=0 // pred_check_branch
    %333 = sbr.rel (0) target = $region25
  $region24: #{tpu_custom_call.1} parent=0 // pred_region
    _
  $region25: #{tpu_custom_call.1} parent=0 // pred_fallthru
    _
  // Predicated region
  $region26: #{tpu_custom_call.1} parent=0 // pred_check
    _
  $region27: #{tpu_custom_call.1} parent=0 // pred_check_branch
    %335 = sbr.rel (0) target = $region29
  $region28: #{tpu_custom_call.1} parent=0 // pred_region
    _
  $region29: #{tpu_custom_call.1} parent=0 // pred_fallthru
    _

</llo_original>
